<compile_context>
chip_gen: v6e
topology: v6e:2x2x1
jax: 0.10.0
libtpu: 0.0.40
codegen_flags: <defaults>
</compile_context>

<pallas_src>
import jax
import jax.numpy as jnp
from jax import lax
from jax.experimental import pallas as pl
from jax.experimental.pallas import tpu as pltpu


def _softmax_last(x):
    m = jnp.max(x, axis=-1, keepdims=True)
    e = jnp.exp(x - m)
    # exact division; pl.reciprocal(approx=True) would relax the 1e-5 score tolerance
    return e / jnp.sum(e, axis=-1, keepdims=True)


def ca_kernel(video_ref, text_ref, bias_ref,
              vatt_ref, tatt_ref, vsc_ref, tsc_ref):
    # video_ref : (V, D)     video sample b (leading grid dim squeezed)
    # text_ref  : (B, T, D)  all text samples (resident across grid)
    # bias_ref  : (B, 1, T)  additive mask bias (0 valid / -1e30 masked)
    # vatt_ref  : (B, V, D)  video_embd_att[b]
    # tatt_ref  : (B, T, D)  text_embd_att[b]
    # vsc_ref   : (B, V, T)  vis_att_scores[b]
    # tsc_ref   : (B, T, V)  text_att_scores[b]
    v = video_ref[...]                                   # (V, D)
    n_text = text_ref.shape[0]
    scale = float(v.shape[-1]) ** -0.5
    dn = (((1,), (1,)), ((), ()))                        # contract D on both sides

    def per_text(j, carry):
        t = text_ref[j]                                  # (T, D)  text sample j
        bias = bias_ref[j]                               # (1, T)

        # Both score layouts directly on the MXU (no XLU transpose of VMEM tiles).
        s_vt = lax.dot_general(v, t, dn,
                               preferred_element_type=jnp.float32) * scale   # (V, T)
        s_tv = lax.dot_general(t, v, dn,
                               preferred_element_type=jnp.float32) * scale   # (T, V)

        # Text attention: softmax over video tokens (unmasked).
        a_text = _softmax_last(s_tv)                                          # (T, V)
        t_att = jnp.dot(a_text.astype(v.dtype), v,
                        preferred_element_type=jnp.float32)                   # (T, D)

        # Video attention: additive mask bias over text tokens, softmax over T.
        a_vis = _softmax_last(s_vt + bias)                                    # (V, T)
        v_att = jnp.dot(a_vis.astype(t.dtype), t,
                        preferred_element_type=jnp.float32)                   # (V, D)

        vatt_ref[j] = v_att.astype(vatt_ref.dtype)
        tatt_ref[j] = t_att.astype(tatt_ref.dtype)
        vsc_ref[j] = a_vis.astype(vsc_ref.dtype)
        tsc_ref[j] = a_text.astype(tsc_ref.dtype)
        return carry

    lax.fori_loop(0, n_text, per_text, 0, unroll=(n_text <= 8))


def ca_encoder_forward(video_embd, text_embd, mask, *, compute_dtype=jnp.float32):
    """Pallas implementation of CAEncoder.forward (training path, 3-D video)."""
    B, V, D = video_embd.shape
    Bt, T, Dt = text_embd.shape
    assert B == Bt and D == Dt
    assert mask.shape == (B, T)

    video = video_embd.astype(compute_dtype)
    text = text_embd.astype(compute_dtype)
    # Additive mask bias precomputed outside the kernel (robust to all-masked rows).
    bias = jnp.where(mask != 0, 0.0, -1e30).astype(jnp.float32).reshape(B, 1, T)

    out_shapes = (
        jax.ShapeDtypeStruct((B, B, V, D), jnp.float32),   # video_embd_att
        jax.ShapeDtypeStruct((B, B, T, D), jnp.float32),   # text_embd_att
        jax.ShapeDtypeStruct((B, B, V, T), jnp.float32),   # vis_att_scores
        jax.ShapeDtypeStruct((B, B, T, V), jnp.float32),   # text_att_scores
    )

    grid_spec = pltpu.PrefetchScalarGridSpec(
        num_scalar_prefetch=0,
        grid=(B,),
        in_specs=[
            pl.BlockSpec((None, V, D), lambda b: (b, 0, 0)),   # video[b]
            pl.BlockSpec((B, T, D), lambda b: (0, 0, 0)),      # all text (resident)
            pl.BlockSpec((B, 1, T), lambda b: (0, 0, 0)),      # mask bias (resident)
        ],
        out_specs=[
            pl.BlockSpec((None, B, V, D), lambda b: (b, 0, 0, 0)),
            pl.BlockSpec((None, B, T, D), lambda b: (b, 0, 0, 0)),
            pl.BlockSpec((None, B, V, T), lambda b: (b, 0, 0, 0)),
            pl.BlockSpec((None, B, T, V), lambda b: (b, 0, 0, 0)),
        ],
    )

    # Advisory cost for XLA scheduling around the custom call.
    flops = 8 * B * B * V * T * D                   # 4 matmuls * 2 flops/MAC
    transcendentals = 2 * B * B * V * T             # exp count in the two softmaxes
    bytes_accessed = (4 * (B * V * D + B * T * D + B * T)
                      + 4 * B * B * (V * D + T * D + 2 * V * T))
    cost = pl.CostEstimate(flops=flops, transcendentals=transcendentals,
                           bytes_accessed=bytes_accessed)

    # VMEM limit derived from the per-step block footprint (works on v5e/v6e/v7x).
    in_itemsize = jnp.dtype(compute_dtype).itemsize
    block_bytes = (in_itemsize * (V * D + B * T * D)
                   + 4 * B * T
                   + 4 * B * (V * D + T * D + 2 * V * T))
    vmem_limit = int(min(max(2 * block_bytes + (4 << 20), 32 << 20), 64 << 20))

    return pl.pallas_call(
        ca_kernel,
        out_shape=out_shapes,
        grid_spec=grid_spec,
        cost_estimate=cost,
        compiler_params=pltpu.CompilerParams(
            dimension_semantics=("parallel",),
            vmem_limit_bytes=vmem_limit),
    )(video, text, bias)


def ca_encoder_reference(video, text, mask):
    """Plain-JAX mirror of the PyTorch training-mode 3-D path (no residual)."""
    B, V, D = video.shape
    s = jnp.einsum('bvd,jtd->bjvt', video, text) / jnp.sqrt(jnp.float32(D))
    text_scores = jax.nn.softmax(jnp.swapaxes(s, -1, -2), axis=-1)            # (B,B,T,V)
    text_att = jnp.einsum('bjtv,bvd->bjtd', text_scores, video)               # (B,B,T,D)
    s_masked = jnp.where(mask[None, :, None, :] != 0, s, -jnp.inf)
    vis_scores = jax.nn.softmax(s_masked, axis=-1)                            # (B,B,V,T)
    video_att = jnp.einsum('bjvt,jtd->bjvd', vis_scores, text)                # (B,B,V,D)
    return video_att, text_att, vis_scores, text_scores


if __name__ == "__main__":
    key = jax.random.PRNGKey(0)
    k1, k2, k3 = jax.random.split(key, 3)

    B, V, T, D = 2, 8, 8, 128   # small shapes; D is the CAEncoder feature dim

    video_embd = jax.random.normal(k1, (B, V, D), dtype=jnp.float32)
    text_embd = jax.random.normal(k2, (B, T, D), dtype=jnp.float32)
    # boolean mask over text tokens; guarantee at least one valid token per sample
    mask = jax.random.bernoulli(k3, p=0.7, shape=(B, T))
    mask = mask.at[:, 0].set(True)

    outs = ca_encoder_forward(video_embd, text_embd, mask)
    outs = jax.tree_util.tree_map(jax.block_until_ready, outs)
    v_att, t_att, v_sc, t_sc = outs

    # correctness check vs plain-JAX reference of the PyTorch semantics
    rv_att, rt_att, rv_sc, rt_sc = ca_encoder_reference(video_embd, text_embd, mask)
    assert jnp.allclose(v_att, rv_att, atol=1e-4, rtol=1e-4)
    assert jnp.allclose(t_att, rt_att, atol=1e-4, rtol=1e-4)
    assert jnp.allclose(v_sc, rv_sc, atol=1e-5, rtol=1e-5)
    assert jnp.allclose(t_sc, rt_sc, atol=1e-5, rtol=1e-5)

    assert v_att.shape == (B, B, V, D)
    assert t_att.shape == (B, B, T, D)
    assert v_sc.shape == (B, B, V, T)
    assert t_sc.shape == (B, B, T, V)

    print("KERNEL_OK")
</pallas_src>

<mosaic_0001>
module attributes {stable_mosaic.version = 11 : i64} {
  func.func @ca_kernel(%arg0: i32, %arg1: memref<1x8x128xf32, #tpu.memory_space<vmem>>, %arg2: memref<2x8x128xf32, #tpu.memory_space<vmem>>, %arg3: memref<2x1x8xf32, #tpu.memory_space<vmem>>, %arg4: memref<1x2x8x128xf32, #tpu.memory_space<vmem>>, %arg5: memref<1x2x8x128xf32, #tpu.memory_space<vmem>>, %arg6: memref<1x2x8x8xf32, #tpu.memory_space<vmem>>, %arg7: memref<1x2x8x8xf32, #tpu.memory_space<vmem>>) attributes {dimension_semantics = [#tpu.dimension_semantics<parallel>], iteration_bounds = array<i64: 2>, scalar_prefetch = 0 : i64, scratch_operands = 0 : i64, tpu.core_type = #tpu.core_type<tc>, window_params = [{transform_indices = @transform_0, window_bounds = array<i64: 1, 8, 128>}, {pipeline_mode = #tpu.pipeline_mode<synchronous>, transform_indices = @transform_1, window_bounds = array<i64: 2, 8, 128>}, {pipeline_mode = #tpu.pipeline_mode<synchronous>, transform_indices = @transform_2, window_bounds = array<i64: 2, 1, 8>}, {transform_indices = @transform_3, window_bounds = array<i64: 1, 2, 8, 128>}, {transform_indices = @transform_4, window_bounds = array<i64: 1, 2, 8, 128>}, {transform_indices = @transform_5, window_bounds = array<i64: 1, 2, 8, 8>}, {transform_indices = @transform_6, window_bounds = array<i64: 1, 2, 8, 8>}]} {
    %c0 = arith.constant 0 : index
    %c0_0 = arith.constant 0 : index
    %c0_1 = arith.constant 0 : index
    %0 = vector.load %arg1[%c0, %c0_0, %c0_1] : memref<1x8x128xf32, #tpu.memory_space<vmem>>, vector<1x8x128xf32>
    %1 = vector.shape_cast %0 : vector<1x8x128xf32> to vector<8x128xf32>
    %c0_i32 = arith.constant 0 : i32
    %2 = arith.index_cast %c0_i32 : i32 to index
    %c0_2 = arith.constant 0 : index
    %c0_3 = arith.constant 0 : index
    %3 = vector.load %arg2[%2, %c0_2, %c0_3] : memref<2x8x128xf32, #tpu.memory_space<vmem>>, vector<1x8x128xf32>
    %4 = vector.shape_cast %3 : vector<1x8x128xf32> to vector<8x128xf32>
    %5 = arith.index_cast %c0_i32 : i32 to index
    %c0_4 = arith.constant 0 : index
    %c0_5 = arith.constant 0 : index
    %6 = vector.load %arg3[%5, %c0_4, %c0_5] : memref<2x1x8xf32, #tpu.memory_space<vmem>>, vector<1x1x8xf32>
    %7 = vector.shape_cast %6 : vector<1x1x8xf32> to vector<1x8xf32>
    %cst = arith.constant dense<0.000000e+00> : vector<8x8xf32>
    %8 = tpu.matmul %1, %4, %cst {dimension_numbers = #tpu.dot_dimension_numbers<[1], [1], [0], [0], [0, 0, 1, 0], [], []>} : vector<8x128xf32>, vector<8x128xf32>, vector<8x8xf32> -> vector<8x8xf32>
    %cst_6 = arith.constant 0.0883883461 : f32
    %9 = vector.broadcast %cst_6 : f32 to vector<8x8xf32>
    %10 = arith.mulf %8, %9 : vector<8x8xf32>
    %cst_7 = arith.constant dense<0.000000e+00> : vector<8x8xf32>
    %11 = tpu.matmul %4, %1, %cst_7 {dimension_numbers = #tpu.dot_dimension_numbers<[1], [1], [0], [0], [0, 0, 1, 0], [], []>} : vector<8x128xf32>, vector<8x128xf32>, vector<8x8xf32> -> vector<8x8xf32>
    %cst_8 = arith.constant 0.0883883461 : f32
    %12 = vector.broadcast %cst_8 : f32 to vector<8x8xf32>
    %13 = arith.mulf %11, %12 : vector<8x8xf32>
    %cst_9 = arith.constant dense<0xFF800000> : vector<8xf32>
    %14 = vector.multi_reduction <maximumf>, %13, %cst_9 [1] : vector<8x8xf32> to vector<8xf32>
    %15 = vector.shape_cast %14 : vector<8xf32> to vector<8x1xf32>
    %16 = vector.broadcast %15 : vector<8x1xf32> to vector<8x8xf32>
    %17 = arith.subf %13, %16 : vector<8x8xf32>
    %18 = math.exp %17 : vector<8x8xf32>
    %cst_10 = arith.constant dense<0.000000e+00> : vector<8xf32>
    %19 = vector.multi_reduction <add>, %18, %cst_10 [1] : vector<8x8xf32> to vector<8xf32>
    %20 = vector.shape_cast %19 : vector<8xf32> to vector<8x1xf32>
    %21 = vector.broadcast %20 : vector<8x1xf32> to vector<8x8xf32>
    %22 = arith.divf %18, %21 : vector<8x8xf32>
    %cst_11 = arith.constant dense<0.000000e+00> : vector<8x128xf32>
    %23 = tpu.matmul %22, %1, %cst_11 {dimension_numbers = #tpu.dot_dimension_numbers<[1], [0], [0], [1], [0, 0, 1, 1], [], []>} : vector<8x8xf32>, vector<8x128xf32>, vector<8x128xf32> -> vector<8x128xf32>
    %24 = vector.broadcast %7 : vector<1x8xf32> to vector<8x8xf32>
    %25 = arith.addf %10, %24 : vector<8x8xf32>
    %cst_12 = arith.constant dense<0xFF800000> : vector<8xf32>
    %26 = vector.multi_reduction <maximumf>, %25, %cst_12 [1] : vector<8x8xf32> to vector<8xf32>
    %27 = vector.shape_cast %26 : vector<8xf32> to vector<8x1xf32>
    %28 = vector.broadcast %27 : vector<8x1xf32> to vector<8x8xf32>
    %29 = arith.subf %25, %28 : vector<8x8xf32>
    %30 = math.exp %29 : vector<8x8xf32>
    %cst_13 = arith.constant dense<0.000000e+00> : vector<8xf32>
    %31 = vector.multi_reduction <add>, %30, %cst_13 [1] : vector<8x8xf32> to vector<8xf32>
    %32 = vector.shape_cast %31 : vector<8xf32> to vector<8x1xf32>
    %33 = vector.broadcast %32 : vector<8x1xf32> to vector<8x8xf32>
    %34 = arith.divf %30, %33 : vector<8x8xf32>
    %cst_14 = arith.constant dense<0.000000e+00> : vector<8x128xf32>
    %35 = tpu.matmul %34, %4, %cst_14 {dimension_numbers = #tpu.dot_dimension_numbers<[1], [0], [0], [1], [0, 0, 1, 1], [], []>} : vector<8x8xf32>, vector<8x128xf32>, vector<8x128xf32> -> vector<8x128xf32>
    %c0_15 = arith.constant 0 : index
    %36 = arith.index_cast %c0_i32 : i32 to index
    %c0_16 = arith.constant 0 : index
    %c0_17 = arith.constant 0 : index
    %37 = vector.load %arg4[%c0_15, %36, %c0_16, %c0_17] : memref<1x2x8x128xf32, #tpu.memory_space<vmem>>, vector<1x1x8x128xf32>
    %38 = vector.shape_cast %37 : vector<1x1x8x128xf32> to vector<8x128xf32>
    %39 = vector.shape_cast %35 : vector<8x128xf32> to vector<1x1x8x128xf32>
    tpu.vector_store %arg4[%c0_15, %36, %c0_16, %c0_17], %39 {strides = array<i32>} : memref<1x2x8x128xf32, #tpu.memory_space<vmem>>, vector<1x1x8x128xf32>,
    %c0_18 = arith.constant 0 : index
    %40 = arith.index_cast %c0_i32 : i32 to index
    %c0_19 = arith.constant 0 : index
    %c0_20 = arith.constant 0 : index
    %41 = vector.load %arg5[%c0_18, %40, %c0_19, %c0_20] : memref<1x2x8x128xf32, #tpu.memory_space<vmem>>, vector<1x1x8x128xf32>
    %42 = vector.shape_cast %41 : vector<1x1x8x128xf32> to vector<8x128xf32>
    %43 = vector.shape_cast %23 : vector<8x128xf32> to vector<1x1x8x128xf32>
    tpu.vector_store %arg5[%c0_18, %40, %c0_19, %c0_20], %43 {strides = array<i32>} : memref<1x2x8x128xf32, #tpu.memory_space<vmem>>, vector<1x1x8x128xf32>,
    %c0_21 = arith.constant 0 : index
    %44 = arith.index_cast %c0_i32 : i32 to index
    %c0_22 = arith.constant 0 : index
    %c0_23 = arith.constant 0 : index
    %45 = vector.load %arg6[%c0_21, %44, %c0_22, %c0_23] : memref<1x2x8x8xf32, #tpu.memory_space<vmem>>, vector<1x1x8x8xf32>
    %46 = vector.shape_cast %45 : vector<1x1x8x8xf32> to vector<8x8xf32>
    %47 = vector.shape_cast %34 : vector<8x8xf32> to vector<1x1x8x8xf32>
    tpu.vector_store %arg6[%c0_21, %44, %c0_22, %c0_23], %47 {strides = array<i32>} : memref<1x2x8x8xf32, #tpu.memory_space<vmem>>, vector<1x1x8x8xf32>,
    %c0_24 = arith.constant 0 : index
    %48 = arith.index_cast %c0_i32 : i32 to index
    %c0_25 = arith.constant 0 : index
    %c0_26 = arith.constant 0 : index
    %49 = vector.load %arg7[%c0_24, %48, %c0_25, %c0_26] : memref<1x2x8x8xf32, #tpu.memory_space<vmem>>, vector<1x1x8x8xf32>
    %50 = vector.shape_cast %49 : vector<1x1x8x8xf32> to vector<8x8xf32>
    %51 = vector.shape_cast %22 : vector<8x8xf32> to vector<1x1x8x8xf32>
    tpu.vector_store %arg7[%c0_24, %48, %c0_25, %c0_26], %51 {strides = array<i32>} : memref<1x2x8x8xf32, #tpu.memory_space<vmem>>, vector<1x1x8x8xf32>,
    %c1_i32 = arith.constant 1 : i32
    %52 = arith.index_cast %c1_i32 : i32 to index
    %c0_27 = arith.constant 0 : index
    %c0_28 = arith.constant 0 : index
    %53 = vector.load %arg2[%52, %c0_27, %c0_28] : memref<2x8x128xf32, #tpu.memory_space<vmem>>, vector<1x8x128xf32>
    %54 = vector.shape_cast %53 : vector<1x8x128xf32> to vector<8x128xf32>
    %55 = arith.index_cast %c1_i32 : i32 to index
    %c0_29 = arith.constant 0 : index
    %c0_30 = arith.constant 0 : index
    %56 = vector.load %arg3[%55, %c0_29, %c0_30] : memref<2x1x8xf32, #tpu.memory_space<vmem>>, vector<1x1x8xf32>
    %57 = vector.shape_cast %56 : vector<1x1x8xf32> to vector<1x8xf32>
    %cst_31 = arith.constant dense<0.000000e+00> : vector<8x8xf32>
    %58 = tpu.matmul %1, %54, %cst_31 {dimension_numbers = #tpu.dot_dimension_numbers<[1], [1], [0], [0], [0, 0, 1, 0], [], []>} : vector<8x128xf32>, vector<8x128xf32>, vector<8x8xf32> -> vector<8x8xf32>
    %cst_32 = arith.constant 0.0883883461 : f32
    %59 = vector.broadcast %cst_32 : f32 to vector<8x8xf32>
    %60 = arith.mulf %58, %59 : vector<8x8xf32>
    %cst_33 = arith.constant dense<0.000000e+00> : vector<8x8xf32>
    %61 = tpu.matmul %54, %1, %cst_33 {dimension_numbers = #tpu.dot_dimension_numbers<[1], [1], [0], [0], [0, 0, 1, 0], [], []>} : vector<8x128xf32>, vector<8x128xf32>, vector<8x8xf32> -> vector<8x8xf32>
    %cst_34 = arith.constant 0.0883883461 : f32
    %62 = vector.broadcast %cst_34 : f32 to vector<8x8xf32>
    %63 = arith.mulf %61, %62 : vector<8x8xf32>
    %cst_35 = arith.constant dense<0xFF800000> : vector<8xf32>
    %64 = vector.multi_reduction <maximumf>, %63, %cst_35 [1] : vector<8x8xf32> to vector<8xf32>
    %65 = vector.shape_cast %64 : vector<8xf32> to vector<8x1xf32>
    %66 = vector.broadcast %65 : vector<8x1xf32> to vector<8x8xf32>
    %67 = arith.subf %63, %66 : vector<8x8xf32>
    %68 = math.exp %67 : vector<8x8xf32>
    %cst_36 = arith.constant dense<0.000000e+00> : vector<8xf32>
    %69 = vector.multi_reduction <add>, %68, %cst_36 [1] : vector<8x8xf32> to vector<8xf32>
    %70 = vector.shape_cast %69 : vector<8xf32> to vector<8x1xf32>
    %71 = vector.broadcast %70 : vector<8x1xf32> to vector<8x8xf32>
    %72 = arith.divf %68, %71 : vector<8x8xf32>
    %cst_37 = arith.constant dense<0.000000e+00> : vector<8x128xf32>
    %73 = tpu.matmul %72, %1, %cst_37 {dimension_numbers = #tpu.dot_dimension_numbers<[1], [0], [0], [1], [0, 0, 1, 1], [], []>} : vector<8x8xf32>, vector<8x128xf32>, vector<8x128xf32> -> vector<8x128xf32>
    %74 = vector.broadcast %57 : vector<1x8xf32> to vector<8x8xf32>
    %75 = arith.addf %60, %74 : vector<8x8xf32>
    %cst_38 = arith.constant dense<0xFF800000> : vector<8xf32>
    %76 = vector.multi_reduction <maximumf>, %75, %cst_38 [1] : vector<8x8xf32> to vector<8xf32>
    %77 = vector.shape_cast %76 : vector<8xf32> to vector<8x1xf32>
    %78 = vector.broadcast %77 : vector<8x1xf32> to vector<8x8xf32>
    %79 = arith.subf %75, %78 : vector<8x8xf32>
    %80 = math.exp %79 : vector<8x8xf32>
    %cst_39 = arith.constant dense<0.000000e+00> : vector<8xf32>
    %81 = vector.multi_reduction <add>, %80, %cst_39 [1] : vector<8x8xf32> to vector<8xf32>
    %82 = vector.shape_cast %81 : vector<8xf32> to vector<8x1xf32>
    %83 = vector.broadcast %82 : vector<8x1xf32> to vector<8x8xf32>
    %84 = arith.divf %80, %83 : vector<8x8xf32>
    %cst_40 = arith.constant dense<0.000000e+00> : vector<8x128xf32>
    %85 = tpu.matmul %84, %54, %cst_40 {dimension_numbers = #tpu.dot_dimension_numbers<[1], [0], [0], [1], [0, 0, 1, 1], [], []>} : vector<8x8xf32>, vector<8x128xf32>, vector<8x128xf32> -> vector<8x128xf32>
    %c0_41 = arith.constant 0 : index
    %86 = arith.index_cast %c1_i32 : i32 to index
    %c0_42 = arith.constant 0 : index
    %c0_43 = arith.constant 0 : index
    %87 = vector.load %arg4[%c0_41, %86, %c0_42, %c0_43] : memref<1x2x8x128xf32, #tpu.memory_space<vmem>>, vector<1x1x8x128xf32>
    %88 = vector.shape_cast %87 : vector<1x1x8x128xf32> to vector<8x128xf32>
    %89 = vector.shape_cast %85 : vector<8x128xf32> to vector<1x1x8x128xf32>
    tpu.vector_store %arg4[%c0_41, %86, %c0_42, %c0_43], %89 {strides = array<i32>} : memref<1x2x8x128xf32, #tpu.memory_space<vmem>>, vector<1x1x8x128xf32>,
    %c0_44 = arith.constant 0 : index
    %90 = arith.index_cast %c1_i32 : i32 to index
    %c0_45 = arith.constant 0 : index
    %c0_46 = arith.constant 0 : index
    %91 = vector.load %arg5[%c0_44, %90, %c0_45, %c0_46] : memref<1x2x8x128xf32, #tpu.memory_space<vmem>>, vector<1x1x8x128xf32>
    %92 = vector.shape_cast %91 : vector<1x1x8x128xf32> to vector<8x128xf32>
    %93 = vector.shape_cast %73 : vector<8x128xf32> to vector<1x1x8x128xf32>
    tpu.vector_store %arg5[%c0_44, %90, %c0_45, %c0_46], %93 {strides = array<i32>} : memref<1x2x8x128xf32, #tpu.memory_space<vmem>>, vector<1x1x8x128xf32>,
    %c0_47 = arith.constant 0 : index
    %94 = arith.index_cast %c1_i32 : i32 to index
    %c0_48 = arith.constant 0 : index
    %c0_49 = arith.constant 0 : index
    %95 = vector.load %arg6[%c0_47, %94, %c0_48, %c0_49] : memref<1x2x8x8xf32, #tpu.memory_space<vmem>>, vector<1x1x8x8xf32>
    %96 = vector.shape_cast %95 : vector<1x1x8x8xf32> to vector<8x8xf32>
    %97 = vector.shape_cast %84 : vector<8x8xf32> to vector<1x1x8x8xf32>
    tpu.vector_store %arg6[%c0_47, %94, %c0_48, %c0_49], %97 {strides = array<i32>} : memref<1x2x8x8xf32, #tpu.memory_space<vmem>>, vector<1x1x8x8xf32>,
    %c0_50 = arith.constant 0 : index
    %98 = arith.index_cast %c1_i32 : i32 to index
    %c0_51 = arith.constant 0 : index
    %c0_52 = arith.constant 0 : index
    %99 = vector.load %arg7[%c0_50, %98, %c0_51, %c0_52] : memref<1x2x8x8xf32, #tpu.memory_space<vmem>>, vector<1x1x8x8xf32>
    %100 = vector.shape_cast %99 : vector<1x1x8x8xf32> to vector<8x8xf32>
    %101 = vector.shape_cast %72 : vector<8x8xf32> to vector<1x1x8x8xf32>
    tpu.vector_store %arg7[%c0_50, %98, %c0_51, %c0_52], %101 {strides = array<i32>} : memref<1x2x8x8xf32, #tpu.memory_space<vmem>>, vector<1x1x8x8xf32>,
    %c2_i32 = arith.constant 2 : i32
    return
  }
  func.func @transform_0(%arg0: i32) -> (i32, i32, i32) {
    %c0_i32 = arith.constant 0 : i32
    %c0_i32_0 = arith.constant 0 : i32
    %c0_i32_1 = arith.constant 0 : i32
    return %arg0, %c0_i32, %c0_i32_0 : i32, i32, i32
  }
  func.func @transform_1(%arg0: i32) -> (i32, i32, i32) {
    %c0_i32 = arith.constant 0 : i32
    %c0_i32_0 = arith.constant 0 : i32
    %c0_i32_1 = arith.constant 0 : i32
    %c0_i32_2 = arith.constant 0 : i32
    return %c0_i32, %c0_i32_0, %c0_i32_1 : i32, i32, i32
  }
  func.func @transform_2(%arg0: i32) -> (i32, i32, i32) {
    %c0_i32 = arith.constant 0 : i32
    %c0_i32_0 = arith.constant 0 : i32
    %c0_i32_1 = arith.constant 0 : i32
    %c0_i32_2 = arith.constant 0 : i32
    return %c0_i32, %c0_i32_0, %c0_i32_1 : i32, i32, i32
  }
  func.func @transform_3(%arg0: i32) -> (i32, i32, i32, i32) {
    %c0_i32 = arith.constant 0 : i32
    %c0_i32_0 = arith.constant 0 : i32
    %c0_i32_1 = arith.constant 0 : i32
    %c0_i32_2 = arith.constant 0 : i32
    return %arg0, %c0_i32, %c0_i32_0, %c0_i32_1 : i32, i32, i32, i32
  }
  func.func @transform_4(%arg0: i32) -> (i32, i32, i32, i32) {
    %c0_i32 = arith.constant 0 : i32
    %c0_i32_0 = arith.constant 0 : i32
    %c0_i32_1 = arith.constant 0 : i32
    %c0_i32_2 = arith.constant 0 : i32
    return %arg0, %c0_i32, %c0_i32_0, %c0_i32_1 : i32, i32, i32, i32
  }
  func.func @transform_5(%arg0: i32) -> (i32, i32, i32, i32) {
    %c0_i32 = arith.constant 0 : i32
    %c0_i32_0 = arith.constant 0 : i32
    %c0_i32_1 = arith.constant 0 : i32
    %c0_i32_2 = arith.constant 0 : i32
    return %arg0, %c0_i32, %c0_i32_0, %c0_i32_1 : i32, i32, i32, i32
  }
  func.func @transform_6(%arg0: i32) -> (i32, i32, i32, i32) {
    %c0_i32 = arith.constant 0 : i32
    %c0_i32_0 = arith.constant 0 : i32
    %c0_i32_1 = arith.constant 0 : i32
    %c0_i32_2 = arith.constant 0 : i32
    return %arg0, %c0_i32, %c0_i32_0, %c0_i32_1 : i32, i32, i32, i32
  }
}

</mosaic_0001>

<llo_original>
// kernel: tpu_custom_call.1
$region0: #{tpu_custom_call.1}
  #allocation0 [shape = 'u32[]', space=smem, size = 0x4, offset = 0x4, fixed_abs, tag = 'smem constant byte address 0x4 - core index']
  #allocation1 [shape = 'u32[144,128]{1,0:T(1,128)}', space=vmem, size = 0x12000, scoped, tag = 'internal scratch']
  %s0 = inlined_call_operand.hbm [shape: f32[2,8,128], index: 0, kind: input, shape index: {}]
  %s1 = inlined_call_operand.hbm [shape: f32[2,8,128], index: 1, kind: input, shape index: {}]
  %s2 = inlined_call_operand.vmem [shape: f32[2,1,8], index: 2, kind: input, shape index: {}]
  %s3 = inlined_call_operand.hbm [shape: f32[2,2,8,128], index: 3, kind: output, shape index: {0}]
  %s4 = inlined_call_operand.hbm [shape: f32[2,2,8,128], index: 4, kind: output, shape index: {1}]
  %s5 = inlined_call_operand.hbm [shape: f32[2,2,8,8], index: 5, kind: output, shape index: {2}]
  %s6 = inlined_call_operand.hbm [shape: f32[2,2,8,8], index: 6, kind: output, shape index: {3}]
  %7 = xla_tuple %s3, %s4, %s5, %s6
  %s8 = sld [smem:[#allocation0]]
  $region77: #{tpu_custom_call.1} parent=0
    _
  %s10 = ssub.s32 1, %s8
  %s11 = scalar_select 0, %s10, %s8
  $region1: #{tpu_custom_call.1} parent=0
    #allocation2 [shape = 'u8[8192]{0}', space=vmem, size = 0x2000, scoped, tag = 'input window, operand 0']
    #allocation3 [shape = 's32[2]{0}', space=sflag, size = 0x8, scoped, tag = 'scoped memory for tpu_custom_call.1']
    #allocation4 [shape = 's32[2]{0}', space=sflag, size = 0x8, scoped, tag = 'scoped memory for tpu_custom_call.1']
    #allocation5 [shape = 'u8[8192]{0}', space=vmem, size = 0x2000, scoped, tag = 'input window, operand 1, single buffered']
    #allocation6 [shape = 's32[1]{0}', space=sflag, size = 0x4, scoped, tag = 'scoped memory for tpu_custom_call.1']
    #allocation7 [shape = 'u8[16384]{0}', space=vmem, size = 0x4000, scoped, tag = 'output window, operand 0']
    #allocation8 [shape = 'u8[16384]{0}', space=vmem, size = 0x4000, scoped, tag = 'output window, operand 1']
    #allocation9 [shape = 's32[2]{0}', space=sflag, size = 0x8, scoped, tag = 'scoped memory for tpu_custom_call.1']
    #allocation10 [shape = 'u8[16384]{0}', space=vmem, size = 0x4000, scoped, tag = 'output window, operand 2']
    #allocation11 [shape = 'u8[16384]{0}', space=vmem, size = 0x4000, scoped, tag = 'output window, operand 3']
    #allocation12 [shape = 's32[2]{0}', space=sflag, size = 0x8, scoped, tag = 'scoped memory for tpu_custom_call.1']
    %12 = vsyncpa [#allocation3], 0
    %s13 = scalar_lea.sflag [#allocation3], 1
    %14 = vsyncpa %s13, 0
    %15 = vsyncpa [#allocation6], 0
    %16 = vsyncpa [#allocation4], 0
    %s17 = scalar_lea.sflag [#allocation4], 1
    %18 = vsyncpa %s17, 0
    %19 = vsyncpa [#allocation9], 0
    %s20 = scalar_lea.sflag [#allocation9], 1
    %21 = vsyncpa %s20, 0
    %22 = vsyncpa [#allocation12], 0
    %s23 = scalar_lea.sflag [#allocation12], 1
    %24 = vsyncpa %s23, 0
    loop: start=0, step=1, limit=4
    $region2: #{tpu_custom_call.1} parent=1 // loop_pre_header
      _
    $region3: #{tpu_custom_call.1} parent=1 // loop_header
      %s26 = sphi 0, %s30
      %p27 = scmp.ge.s32.totalorder %s26, 4
      %s36 = sphi 0, %s38
      %s39 = sphi 0, %s36
      %s40 = sphi 0, %s39
      %s56 = sphi 0, %s40
      %s60 = sphi 0, %s60
      %s62 = sphi 0, %s60
      %s63 = sphi 0, %s62
      %s77 = sphi 0, %s63
      %s81 = sphi 0, %s81
      %s83 = sphi 0, %s81
      %s84 = sphi 0, %s83
      %s98 = sphi 0, %s84
      %s104 = sphi 0, %s106
      %s107 = sphi 0, %s104
      %s108 = sphi 0, %s107
      %s124 = sphi 0, %s108
      %s130 = sphi 0, %s132
      %s133 = sphi 0, %s130
      %s134 = sphi 0, %s133
      %s150 = sphi 0, %s134
      %s156 = sphi 0, %s158
      %s159 = sphi 0, %s156
      %s160 = sphi 0, %s159
      %s176 = sphi 0, %s160
      %s182 = sphi 0, %s184
      %s185 = sphi 0, %s182
      %s186 = sphi 0, %s185
      %s202 = sphi 0, %s186
    $region4: #{tpu_custom_call.1} parent=1 // loop_header_branch
      %29 = sbr.rel (%p27) target = $region8
    $region5: #{tpu_custom_call.1} parent=1 // loop_body
      %s31 = ssub.s32 %s26, 1
      %s32 = ssub.s32 %s26, 2
      %s33 = sadd.s32 %s26, 1
      %s34 = ssub.s32 %s26, %s33
      %p35 = scmp.eq.s32.totalorder %s34, 0
      %s37 = sadd.s32 %s36, 1
      %s38 = scalar_select %p35, %s36, %s37
      %p41 = pneg %p35
      %p42 = scmp.eq.s32.totalorder %s26, 1
      %p43 = por %p41, %p42
      %p44 = scmp.ne.s32.totalorder %s36, %s39
      %p45 = scmp.eq.s32.totalorder %s26, 0
      %p46 = por %p44, %p45
      %p47 = scmp.ne.s32.totalorder %s36, %s39
      %p48 = scmp.eq.s32.totalorder %s31, 1
      %p49 = por %p47, %p48
      %p50 = scmp.ne.s32.totalorder %s39, %s40
      %p51 = scmp.eq.s32.totalorder %s31, 0
      %p52 = por %p50, %p51
      %p53 = scmp.ne.s32.totalorder %s39, %s40
      %p54 = scmp.eq.s32.totalorder %s32, 1
      %p55 = por %p53, %p54
      %p57 = scmp.ne.s32.totalorder %s40, %s56
      %p58 = scmp.eq.s32.totalorder %s32, 0
      %p59 = por %p57, %p58
      %s61 = sadd.s32 %s60, 1
      %p64 = scmp.eq.s32.totalorder %s26, 1
      %p65 = scmp.ne.s32.totalorder %s60, %s62
      %p66 = scmp.eq.s32.totalorder %s26, 0
      %p67 = por %p65, %p66
      %p68 = scmp.ne.s32.totalorder %s60, %s62
      %p69 = scmp.eq.s32.totalorder %s31, 1
      %p70 = por %p68, %p69
      %p71 = scmp.ne.s32.totalorder %s62, %s63
      %p72 = scmp.eq.s32.totalorder %s31, 0
      %p73 = por %p71, %p72
      %p74 = scmp.ne.s32.totalorder %s62, %s63
      %p75 = scmp.eq.s32.totalorder %s32, 1
      %p76 = por %p74, %p75
      %p78 = scmp.ne.s32.totalorder %s63, %s77
      %p79 = scmp.eq.s32.totalorder %s32, 0
      %p80 = por %p78, %p79
      %s82 = sadd.s32 %s81, 1
      %p85 = scmp.eq.s32.totalorder %s26, 1
      %p86 = scmp.ne.s32.totalorder %s81, %s83
      %p87 = scmp.eq.s32.totalorder %s26, 0
      %p88 = por %p86, %p87
      %p89 = scmp.ne.s32.totalorder %s81, %s83
      %p90 = scmp.eq.s32.totalorder %s31, 1
      %p91 = por %p89, %p90
      %p92 = scmp.ne.s32.totalorder %s83, %s84
      %p93 = scmp.eq.s32.totalorder %s31, 0
      %p94 = por %p92, %p93
      %p95 = scmp.ne.s32.totalorder %s83, %s84
      %p96 = scmp.eq.s32.totalorder %s32, 1
      %p97 = por %p95, %p96
      %p99 = scmp.ne.s32.totalorder %s84, %s98
      %p100 = scmp.eq.s32.totalorder %s32, 0
      %p101 = por %p99, %p100
      %s102 = ssub.s32 %s26, %s33
      %p103 = scmp.eq.s32.totalorder %s102, 0
      %s105 = sadd.s32 %s104, 1
      %s106 = scalar_select %p103, %s104, %s105
      %p109 = pneg %p103
      %p110 = scmp.eq.s32.totalorder %s26, 1
      %p111 = por %p109, %p110
      %p112 = scmp.ne.s32.totalorder %s104, %s107
      %p113 = scmp.eq.s32.totalorder %s26, 0
      %p114 = por %p112, %p113
      %p115 = scmp.ne.s32.totalorder %s104, %s107
      %p116 = scmp.eq.s32.totalorder %s31, 1
      %p117 = por %p115, %p116
      %p118 = scmp.ne.s32.totalorder %s107, %s108
      %p119 = scmp.eq.s32.totalorder %s31, 0
      %p120 = por %p118, %p119
      %p121 = scmp.ne.s32.totalorder %s107, %s108
      %p122 = scmp.eq.s32.totalorder %s32, 1
      %p123 = por %p121, %p122
      %p125 = scmp.ne.s32.totalorder %s108, %s124
      %p126 = scmp.eq.s32.totalorder %s32, 0
      %p127 = por %p125, %p126
      %s128 = ssub.s32 %s26, %s33
      %p129 = scmp.eq.s32.totalorder %s128, 0
      %s131 = sadd.s32 %s130, 1
      %s132 = scalar_select %p129, %s130, %s131
      %p135 = pneg %p129
      %p136 = scmp.eq.s32.totalorder %s26, 1
      %p137 = por %p135, %p136
      %p138 = scmp.ne.s32.totalorder %s130, %s133
      %p139 = scmp.eq.s32.totalorder %s26, 0
      %p140 = por %p138, %p139
      %p141 = scmp.ne.s32.totalorder %s130, %s133
      %p142 = scmp.eq.s32.totalorder %s31, 1
      %p143 = por %p141, %p142
      %p144 = scmp.ne.s32.totalorder %s133, %s134
      %p145 = scmp.eq.s32.totalorder %s31, 0
      %p146 = por %p144, %p145
      %p147 = scmp.ne.s32.totalorder %s133, %s134
      %p148 = scmp.eq.s32.totalorder %s32, 1
      %p149 = por %p147, %p148
      %p151 = scmp.ne.s32.totalorder %s134, %s150
      %p152 = scmp.eq.s32.totalorder %s32, 0
      %p153 = por %p151, %p152
      %s154 = ssub.s32 %s26, %s33
      %p155 = scmp.eq.s32.totalorder %s154, 0
      %s157 = sadd.s32 %s156, 1
      %s158 = scalar_select %p155, %s156, %s157
      %p161 = pneg %p155
      %p162 = scmp.eq.s32.totalorder %s26, 1
      %p163 = por %p161, %p162
      %p164 = scmp.ne.s32.totalorder %s156, %s159
      %p165 = scmp.eq.s32.totalorder %s26, 0
      %p166 = por %p164, %p165
      %p167 = scmp.ne.s32.totalorder %s156, %s159
      %p168 = scmp.eq.s32.totalorder %s31, 1
      %p169 = por %p167, %p168
      %p170 = scmp.ne.s32.totalorder %s159, %s160
      %p171 = scmp.eq.s32.totalorder %s31, 0
      %p172 = por %p170, %p171
      %p173 = scmp.ne.s32.totalorder %s159, %s160
      %p174 = scmp.eq.s32.totalorder %s32, 1
      %p175 = por %p173, %p174
      %p177 = scmp.ne.s32.totalorder %s160, %s176
      %p178 = scmp.eq.s32.totalorder %s32, 0
      %p179 = por %p177, %p178
      %s180 = ssub.s32 %s26, %s33
      %p181 = scmp.eq.s32.totalorder %s180, 0
      %s183 = sadd.s32 %s182, 1
      %s184 = scalar_select %p181, %s182, %s183
      %p187 = pneg %p181
      %p188 = scmp.eq.s32.totalorder %s26, 1
      %p189 = por %p187, %p188
      %p190 = scmp.ne.s32.totalorder %s182, %s185
      %p191 = scmp.eq.s32.totalorder %s26, 0
      %p192 = por %p190, %p191
      %p193 = scmp.ne.s32.totalorder %s182, %s185
      %p194 = scmp.eq.s32.totalorder %s31, 1
      %p195 = por %p193, %p194
      %p196 = scmp.ne.s32.totalorder %s185, %s186
      %p197 = scmp.eq.s32.totalorder %s31, 0
      %p198 = por %p196, %p197
      %p199 = scmp.ne.s32.totalorder %s185, %s186
      %p200 = scmp.eq.s32.totalorder %s32, 1
      %p201 = por %p199, %p200
      %p203 = scmp.ne.s32.totalorder %s186, %s202
      %p204 = scmp.eq.s32.totalorder %s32, 0
      %p205 = por %p203, %p204
      %p206 = scmp.le.s32.totalorder 1, %s26
      %p207 = scmp.lt.s32.totalorder %s26, 3
      %p208 = pnand %p206, %p207
      %p209 = pneg %p208
      // Predicated region
      $region9: #{tpu_custom_call.1} parent=5 // pred_check
        _
      $region10: #{tpu_custom_call.1} parent=5 // pred_check_branch
        %211 = sbr.rel (%p208) target = $region12
      $region11: #{tpu_custom_call.1} parent=5 // pred_region
        %s212 = ssub.s32 %s26, 1
        // Predicated region
        $region13: #{tpu_custom_call.1} parent=11 // pred_check
          %p213 = pneg %p73
        $region14: #{tpu_custom_call.1} parent=11 // pred_check_branch
          %215 = sbr.rel (%p213) target = $region16
        $region15: #{tpu_custom_call.1} parent=11 // pred_region
          %s217 = ssub.s32 256, 256
          %218 = vsyncadd [#allocation6], %s217
          %s219 = sshll.u32 [#allocation5], 4
          %s220 = int_to_ptr.vmem [resolvable:$true] %s219
          %225 = dma.hbm_to_vmem [thread:$0]  %s1, 256, %s220, [#allocation6], 128, 128, 8
        $region16: #{tpu_custom_call.1} parent=11 // pred_fallthru
          _
        // Predicated region
        $region17: #{tpu_custom_call.1} parent=11 // pred_check
          %p226 = pneg %p94
        $region18: #{tpu_custom_call.1} parent=11 // pred_check_branch
          %228 = sbr.rel (%p226) target = $region20
        $region19: #{tpu_custom_call.1} parent=11 // pred_region
          _
        $region20: #{tpu_custom_call.1} parent=11 // pred_fallthru
          _
      $region12: #{tpu_custom_call.1} parent=5 // pred_fallthru
        _
      %p229 = scmp.lt.s32.totalorder %s26, 2
      // Predicated region
      $region21: #{tpu_custom_call.1} parent=5 // pred_check
        %p230 = pneg %p229
      $region22: #{tpu_custom_call.1} parent=5 // pred_check_branch
        %232 = sbr.rel (%p230) target = $region24
      $region23: #{tpu_custom_call.1} parent=5 // pred_region
        // Predicated region
        $region25: #{tpu_custom_call.1} parent=23 // pred_check
          %p233 = pneg %p46
        $region26: #{tpu_custom_call.1} parent=23 // pred_check_branch
          %235 = sbr.rel (%p233) target = $region28
        $region27: #{tpu_custom_call.1} parent=23 // pred_region
          %s236 = sand.u32 %s36, 1
          %s237 = scalar_lea.sflag [#allocation3], %s236
          %s238 = sand.u32 %s36, 1
          %s239 = smul.addr %s238, 8
          %s240 = scalar_lea.vmem [#allocation2], %s239
          %s242 = ssub.s32 128, 128
          %243 = vsyncadd %s237, %s242
          %s244 = smul.addr %s26, 128
          %s245 = scalar_lea.hbm %s0, %s244
          %s247 = sshll.u32 %s240, 4
          %s248 = int_to_ptr.vmem [resolvable:$true] %s247
          %250 = dma.hbm_to_vmem [thread:$0]  %s245, 128, %s248, %s237
        $region28: #{tpu_custom_call.1} parent=23 // pred_fallthru
          _
      $region24: #{tpu_custom_call.1} parent=5 // pred_fallthru
        _
      %p251 = scmp.le.s32.totalorder 1, %s26
      %p252 = scmp.lt.s32.totalorder %s26, 3
      %p253 = pnand %p251, %p252
      %p254 = pneg %p253
      // Predicated region
      $region29: #{tpu_custom_call.1} parent=5 // pred_check
        _
      $region30: #{tpu_custom_call.1} parent=5 // pred_check_branch
        %256 = sbr.rel (%p253) target = $region32
      $region31: #{tpu_custom_call.1} parent=5 // pred_region
        %s257 = ssub.s32 %s26, 1
        %s258 = sand.u32 %s39, 1
        %s259 = scalar_lea.sflag [#allocation3], %s258
        %s260 = sand.u32 %s39, 1
        %s261 = smul.addr %s260, 8
        %s262 = scalar_lea.vmem [#allocation2], %s261
        // Predicated region
        $region33: #{tpu_custom_call.1} parent=31 // pred_check
          %p263 = pneg %p52
        $region34: #{tpu_custom_call.1} parent=31 // pred_check_branch
          %265 = sbr.rel (%p263) target = $region36
        $region35: #{tpu_custom_call.1} parent=31 // pred_region
          %266 = dma.done %s259, 128
        $region36: #{tpu_custom_call.1} parent=31 // pred_fallthru
          _
        // Predicated region
        $region37: #{tpu_custom_call.1} parent=31 // pred_check
          %p267 = pneg %p73
        $region38: #{tpu_custom_call.1} parent=31 // pred_check_branch
          %269 = sbr.rel (%p267) target = $region40
        $region39: #{tpu_custom_call.1} parent=31 // pred_region
          %270 = dma.done [#allocation6], 256
        $region40: #{tpu_custom_call.1} parent=31 // pred_fallthru
          _
        %s271 = sand.u32 %s39, 1
        %s272 = scalar_lea.sflag [#allocation3], %s271
        %s273 = sand.u32 %s39, 1
        %s274 = smul.addr %s273, 8
        %s275 = scalar_lea.vmem [#allocation2], %s274
        %p276 = pneg %p52
        %p277 = pneg %p49
        %p278 = pneg %p73
        %p279 = pneg %p70
        %p280 = pneg %p94
        %p281 = pneg %p91
        %p282 = pneg %p120
        %p283 = pneg %p117
        %s284 = sand.u32 %s107, 1
        %s285 = scalar_lea.sflag [#allocation4], %s284
        %s286 = sand.u32 %s107, 1
        %s287 = smul.addr %s286, 16
        %s288 = scalar_lea.vmem [#allocation7], %s287
        %p289 = pneg %p146
        %p290 = pneg %p143
        %s291 = sand.u32 %s31, 1
        %s292 = scalar_lea.sflag [#allocation9], %s291
        %s293 = sand.u32 %s133, 1
        %s294 = smul.addr %s293, 16
        %s295 = scalar_lea.vmem [#allocation8], %s294
        %p296 = pneg %p172
        %p297 = pneg %p169
        %s298 = sand.u32 %s31, 1
        %s299 = scalar_lea.sflag [#allocation9], %s298
        %s300 = sand.u32 %s159, 1
        %s301 = smul.addr %s300, 16
        %s302 = scalar_lea.vmem [#allocation10], %s301
        %p303 = pneg %p198
        %p304 = pneg %p195
        %s305 = sand.u32 %s185, 1
        %s306 = scalar_lea.sflag [#allocation12], %s305
        %s307 = sand.u32 %s185, 1
        %s308 = smul.addr %s307, 16
        %s309 = scalar_lea.vmem [#allocation11], %s308
        %v310 = vld [vmem:[%s262] sm:$0xff]
        %v311 = vld [vmem:[#allocation5] sm:$0xff]
        %v312 = vld [vmem:[%s2] sm:$0x1]
        %313 = vmatprep.subr.mxu0 0.0
        %314 = vmatpush1.xpose.msra.mxu0 0.0
        %315 = vmatprep.subr.mxu0 0.0
        %316 = vmatpush1.xpose.msra.mxu0 0.0
        %317 = vmatprep.subr.mxu0 0.0
        %318 = vmatpush1.xpose.msra.mxu0 0.0
        %319 = vmatprep.subr.mxu0 0.0
        %320 = vmatpush1.xpose.msra.mxu0 0.0
        %321 = vmatprep.subr.mxu0 0.0
        %322 = vmatpush1.xpose.msra.mxu0 0.0
        %323 = vmatprep.subr.mxu0 0.0
        %324 = vmatpush1.xpose.msra.mxu0 0.0
        %325 = vmatprep.subr.mxu0 0.0
        %326 = vmatpush1.xpose.msra.mxu0 0.0
        %327 = vmatprep.subr.mxu0 0.0
        %328 = vmatpush1.xpose.msra.mxu0 0.0
        %329 = vmatprep.subr.mxu0 0.0
        %330 = vmatpush1.xpose.msra.mxu0 0.0
        %331 = vmatprep.subr.mxu0 0.0
        %332 = vmatpush1.xpose.msra.mxu0 0.0
        %333 = vmatprep.subr.mxu0 0.0
        %334 = vmatpush1.xpose.msra.mxu0 0.0
        %335 = vmatprep.subr.mxu0 0.0
        %336 = vmatpush1.xpose.msra.mxu0 0.0
        %337 = vmatprep.subr.mxu0 0.0
        %338 = vmatpush1.xpose.msra.mxu0 0.0
        %339 = vmatprep.subr.mxu0 0.0
        %340 = vmatpush1.xpose.msra.mxu0 0.0
        %341 = vmatprep.subr.mxu0 0.0
        %342 = vmatpush1.xpose.msra.mxu0 0.0
        %343 = vmatprep.subr.mxu0 0.0
        %344 = vmatpush1.xpose.msra.mxu0 %v311
        %345 = vmatprep.subr.mxu0 0.0
        %346 = vmatpush2.xpose.msra.mxu0 0.0
        %347 = vmatprep.subr.mxu0 0.0
        %348 = vmatpush2.xpose.msra.mxu0 0.0
        %349 = vmatprep.subr.mxu0 0.0
        %350 = vmatpush2.xpose.msra.mxu0 0.0
        %351 = vmatprep.subr.mxu0 0.0
        %352 = vmatpush2.xpose.msra.mxu0 0.0
        %353 = vmatprep.subr.mxu0 0.0
        %354 = vmatpush2.xpose.msra.mxu0 0.0
        %355 = vmatprep.subr.mxu0 0.0
        %356 = vmatpush2.xpose.msra.mxu0 0.0
        %357 = vmatprep.subr.mxu0 0.0
        %358 = vmatpush2.xpose.msra.mxu0 0.0
        %359 = vmatprep.subr.mxu0 0.0
        %360 = vmatpush2.xpose.msra.mxu0 0.0
        %361 = vmatprep.subr.mxu0 0.0
        %362 = vmatpush2.xpose.msra.mxu0 0.0
        %363 = vmatprep.subr.mxu0 0.0
        %364 = vmatpush2.xpose.msra.mxu0 0.0
        %365 = vmatprep.subr.mxu0 0.0
        %366 = vmatpush2.xpose.msra.mxu0 0.0
        %367 = vmatprep.subr.mxu0 0.0
        %368 = vmatpush2.xpose.msra.mxu0 0.0
        %369 = vmatprep.subr.mxu0 0.0
        %370 = vmatpush2.xpose.msra.mxu0 0.0
        %371 = vmatprep.subr.mxu0 0.0
        %372 = vmatpush2.xpose.msra.mxu0 0.0
        %373 = vmatprep.subr.mxu0 0.0
        %374 = vmatpush2.xpose.msra.mxu0 0.0
        %375 = vmatprep.subr.mxu0 0.0
        %376 = vmatpush2.xpose.msra.mxu0 0.0
        %377 = vmatprep.mubr.f32.mxu0 0.0
        %378 = vmatmul.mubr.f32.gmra.mxu0 %v310
        %v379 = vpop.f32.mrf.mxu0
        %v380 = vadd.f32 0.0, %v379
        %v381 = vpop.f32.mrf.mxu0
        %382 = vdwg.mxu0
        %v383 = vmul.f32 %v380, 0.088388346
        %384 = vmatprep.subr.mxu0 0.0
        %385 = vmatpush1.xpose.msra.mxu0 0.0
        %386 = vmatprep.subr.mxu0 0.0
        %387 = vmatpush1.xpose.msra.mxu0 0.0
        %388 = vmatprep.subr.mxu0 0.0
        %389 = vmatpush1.xpose.msra.mxu0 0.0
        %390 = vmatprep.subr.mxu0 0.0
        %391 = vmatpush1.xpose.msra.mxu0 0.0
        %392 = vmatprep.subr.mxu0 0.0
        %393 = vmatpush1.xpose.msra.mxu0 0.0
        %394 = vmatprep.subr.mxu0 0.0
        %395 = vmatpush1.xpose.msra.mxu0 0.0
        %396 = vmatprep.subr.mxu0 0.0
        %397 = vmatpush1.xpose.msra.mxu0 0.0
        %398 = vmatprep.subr.mxu0 0.0
        %399 = vmatpush1.xpose.msra.mxu0 0.0
        %400 = vmatprep.subr.mxu0 0.0
        %401 = vmatpush1.xpose.msra.mxu0 0.0
        %402 = vmatprep.subr.mxu0 0.0
        %403 = vmatpush1.xpose.msra.mxu0 0.0
        %404 = vmatprep.subr.mxu0 0.0
        %405 = vmatpush1.xpose.msra.mxu0 0.0
        %406 = vmatprep.subr.mxu0 0.0
        %407 = vmatpush1.xpose.msra.mxu0 0.0
        %408 = vmatprep.subr.mxu0 0.0
        %409 = vmatpush1.xpose.msra.mxu0 0.0
        %410 = vmatprep.subr.mxu0 0.0
        %411 = vmatpush1.xpose.msra.mxu0 0.0
        %412 = vmatprep.subr.mxu0 0.0
        %413 = vmatpush1.xpose.msra.mxu0 0.0
        %414 = vmatprep.subr.mxu0 0.0
        %415 = vmatpush1.xpose.msra.mxu0 %v310
        %416 = vmatprep.subr.mxu0 0.0
        %417 = vmatpush2.xpose.msra.mxu0 0.0
        %418 = vmatprep.subr.mxu0 0.0
        %419 = vmatpush2.xpose.msra.mxu0 0.0
        %420 = vmatprep.subr.mxu0 0.0
        %421 = vmatpush2.xpose.msra.mxu0 0.0
        %422 = vmatprep.subr.mxu0 0.0
        %423 = vmatpush2.xpose.msra.mxu0 0.0
        %424 = vmatprep.subr.mxu0 0.0
        %425 = vmatpush2.xpose.msra.mxu0 0.0
        %426 = vmatprep.subr.mxu0 0.0
        %427 = vmatpush2.xpose.msra.mxu0 0.0
        %428 = vmatprep.subr.mxu0 0.0
        %429 = vmatpush2.xpose.msra.mxu0 0.0
        %430 = vmatprep.subr.mxu0 0.0
        %431 = vmatpush2.xpose.msra.mxu0 0.0
        %432 = vmatprep.subr.mxu0 0.0
        %433 = vmatpush2.xpose.msra.mxu0 0.0
        %434 = vmatprep.subr.mxu0 0.0
        %435 = vmatpush2.xpose.msra.mxu0 0.0
        %436 = vmatprep.subr.mxu0 0.0
        %437 = vmatpush2.xpose.msra.mxu0 0.0
        %438 = vmatprep.subr.mxu0 0.0
        %439 = vmatpush2.xpose.msra.mxu0 0.0
        %440 = vmatprep.subr.mxu0 0.0
        %441 = vmatpush2.xpose.msra.mxu0 0.0
        %442 = vmatprep.subr.mxu0 0.0
        %443 = vmatpush2.xpose.msra.mxu0 0.0
        %444 = vmatprep.subr.mxu0 0.0
        %445 = vmatpush2.xpose.msra.mxu0 0.0
        %446 = vmatprep.subr.mxu0 0.0
        %447 = vmatpush2.xpose.msra.mxu0 0.0
        %448 = vmatprep.mubr.f32.mxu0 0.0
        %449 = vmatmul.mubr.f32.gmra.mxu0 %v311
        %v450 = vpop.f32.mrf.mxu0
        %v451 = vadd.f32 0.0, %v450
        %v452 = vpop.f32.mrf.mxu0
        %453 = vdwg.mxu0
        %v454 = vmul.f32 %v451, 0.088388346
        %vm455 = vcmask 64512
        %v456 = vsel %vm455, %v454, -inf
        %457 = vmax.xlane.f32.xlu0 %v456
        %v458 = vpop.xlane.xlu0 %457
        %v459 = vsub.f32 %v454, %v458
        %v460 = vmul.f32 %v459, 1.442695
        %v461 = vpow.pop %v460
        %v462 = vsel %vm455, %v461, 0.0
        %463 = vadd.xlane.f32.xlu0 %v462
        %v464 = vpop.xlane.xlu0 %463
        %v465 = vrcp.pop %v464
        %v466 = vmul.f32 %v461, %v465
        %v468 = vsel %vm455, %v466, 0
        %470 = vmatprep.subr.mxu0 0.0
        %471 = vmatpush1.msra.mxu0 0.0
        %472 = vmatprep.subr.mxu0 0.0
        %473 = vmatpush1.msra.mxu0 0.0
        %474 = vmatprep.subr.mxu0 0.0
        %475 = vmatpush1.msra.mxu0 0.0
        %476 = vmatprep.subr.mxu0 0.0
        %477 = vmatpush1.msra.mxu0 0.0
        %478 = vmatprep.subr.mxu0 0.0
        %479 = vmatpush1.msra.mxu0 0.0
        %480 = vmatprep.subr.mxu0 0.0
        %481 = vmatpush1.msra.mxu0 0.0
        %482 = vmatprep.subr.mxu0 0.0
        %483 = vmatpush1.msra.mxu0 0.0
        %484 = vmatprep.subr.mxu0 0.0
        %485 = vmatpush1.msra.mxu0 0.0
        %486 = vmatprep.subr.mxu0 0.0
        %487 = vmatpush1.msra.mxu0 0.0
        %488 = vmatprep.subr.mxu0 0.0
        %489 = vmatpush1.msra.mxu0 0.0
        %490 = vmatprep.subr.mxu0 0.0
        %491 = vmatpush1.msra.mxu0 0.0
        %492 = vmatprep.subr.mxu0 0.0
        %493 = vmatpush1.msra.mxu0 0.0
        %494 = vmatprep.subr.mxu0 0.0
        %495 = vmatpush1.msra.mxu0 0.0
        %496 = vmatprep.subr.mxu0 0.0
        %497 = vmatpush1.msra.mxu0 0.0
        %498 = vmatprep.subr.mxu0 0.0
        %499 = vmatpush1.msra.mxu0 0.0
        %500 = vmatprep.subr.mxu0 0.0
        %501 = vmatpush1.msra.mxu0 %v310
        %502 = vmatprep.subr.mxu0 0.0
        %503 = vmatpush2.msra.mxu0 0.0
        %504 = vmatprep.subr.mxu0 0.0
        %505 = vmatpush2.msra.mxu0 0.0
        %506 = vmatprep.subr.mxu0 0.0
        %507 = vmatpush2.msra.mxu0 0.0
        %508 = vmatprep.subr.mxu0 0.0
        %509 = vmatpush2.msra.mxu0 0.0
        %510 = vmatprep.subr.mxu0 0.0
        %511 = vmatpush2.msra.mxu0 0.0
        %512 = vmatprep.subr.mxu0 0.0
        %513 = vmatpush2.msra.mxu0 0.0
        %514 = vmatprep.subr.mxu0 0.0
        %515 = vmatpush2.msra.mxu0 0.0
        %516 = vmatprep.subr.mxu0 0.0
        %517 = vmatpush2.msra.mxu0 0.0
        %518 = vmatprep.subr.mxu0 0.0
        %519 = vmatpush2.msra.mxu0 0.0
        %520 = vmatprep.subr.mxu0 0.0
        %521 = vmatpush2.msra.mxu0 0.0
        %522 = vmatprep.subr.mxu0 0.0
        %523 = vmatpush2.msra.mxu0 0.0
        %524 = vmatprep.subr.mxu0 0.0
        %525 = vmatpush2.msra.mxu0 0.0
        %526 = vmatprep.subr.mxu0 0.0
        %527 = vmatpush2.msra.mxu0 0.0
        %528 = vmatprep.subr.mxu0 0.0
        %529 = vmatpush2.msra.mxu0 0.0
        %530 = vmatprep.subr.mxu0 0.0
        %531 = vmatpush2.msra.mxu0 0.0
        %532 = vmatprep.subr.mxu0 0.0
        %533 = vmatpush2.msra.mxu0 0.0
        %534 = vmatprep.mubr.f32.mxu0 0.0
        %535 = vmatmul.mubr.f32.gmra.mxu0 %v468
        %v536 = vpop.f32.mrf.mxu0
        %v537 = vadd.f32 0.0, %v536
        %v538 = vpop.f32.mrf.mxu0
        %539 = vdwg.mxu0
        %v541 = vlaneseq
        %v542 = vshrl.u32 %v541, 7
        %v543 = vsub.s32 0, %v542
        %v544 = vrot.slane %v312, %v543
        %v546 = vadd.f32 %v383, %v544
        %v547 = vsel %vm455, %v546, -inf
        %548 = vmax.xlane.f32.xlu0 %v547
        %v549 = vpop.xlane.xlu0 %548
        %v550 = vsub.f32 %v546, %v549
        %v551 = vmul.f32 %v550, 1.442695
        %v552 = vpow.pop %v551
        %v553 = vsel %vm455, %v552, 0.0
        %554 = vadd.xlane.f32.xlu0 %v553
        %v555 = vpop.xlane.xlu0 %554
        %v556 = vrcp.pop %v555
        %v557 = vmul.f32 %v552, %v556
        %v559 = vsel %vm455, %v557, 0
        %561 = vmatprep.subr.mxu0 0.0
        %562 = vmatpush1.msra.mxu0 0.0
        %563 = vmatprep.subr.mxu0 0.0
        %564 = vmatpush1.msra.mxu0 0.0
        %565 = vmatprep.subr.mxu0 0.0
        %566 = vmatpush1.msra.mxu0 0.0
        %567 = vmatprep.subr.mxu0 0.0
        %568 = vmatpush1.msra.mxu0 0.0
        %569 = vmatprep.subr.mxu0 0.0
        %570 = vmatpush1.msra.mxu0 0.0
        %571 = vmatprep.subr.mxu0 0.0
        %572 = vmatpush1.msra.mxu0 0.0
        %573 = vmatprep.subr.mxu0 0.0
        %574 = vmatpush1.msra.mxu0 0.0
        %575 = vmatprep.subr.mxu0 0.0
        %576 = vmatpush1.msra.mxu0 0.0
        %577 = vmatprep.subr.mxu0 0.0
        %578 = vmatpush1.msra.mxu0 0.0
        %579 = vmatprep.subr.mxu0 0.0
        %580 = vmatpush1.msra.mxu0 0.0
        %581 = vmatprep.subr.mxu0 0.0
        %582 = vmatpush1.msra.mxu0 0.0
        %583 = vmatprep.subr.mxu0 0.0
        %584 = vmatpush1.msra.mxu0 0.0
        %585 = vmatprep.subr.mxu0 0.0
        %586 = vmatpush1.msra.mxu0 0.0
        %587 = vmatprep.subr.mxu0 0.0
        %588 = vmatpush1.msra.mxu0 0.0
        %589 = vmatprep.subr.mxu0 0.0
        %590 = vmatpush1.msra.mxu0 0.0
        %591 = vmatprep.subr.mxu0 0.0
        %592 = vmatpush1.msra.mxu0 %v311
        %593 = vmatprep.subr.mxu0 0.0
        %594 = vmatpush2.msra.mxu0 0.0
        %595 = vmatprep.subr.mxu0 0.0
        %596 = vmatpush2.msra.mxu0 0.0
        %597 = vmatprep.subr.mxu0 0.0
        %598 = vmatpush2.msra.mxu0 0.0
        %599 = vmatprep.subr.mxu0 0.0
        %600 = vmatpush2.msra.mxu0 0.0
        %601 = vmatprep.subr.mxu0 0.0
        %602 = vmatpush2.msra.mxu0 0.0
        %603 = vmatprep.subr.mxu0 0.0
        %604 = vmatpush2.msra.mxu0 0.0
        %605 = vmatprep.subr.mxu0 0.0
        %606 = vmatpush2.msra.mxu0 0.0
        %607 = vmatprep.subr.mxu0 0.0
        %608 = vmatpush2.msra.mxu0 0.0
        %609 = vmatprep.subr.mxu0 0.0
        %610 = vmatpush2.msra.mxu0 0.0
        %611 = vmatprep.subr.mxu0 0.0
        %612 = vmatpush2.msra.mxu0 0.0
        %613 = vmatprep.subr.mxu0 0.0
        %614 = vmatpush2.msra.mxu0 0.0
        %615 = vmatprep.subr.mxu0 0.0
        %616 = vmatpush2.msra.mxu0 0.0
        %617 = vmatprep.subr.mxu0 0.0
        %618 = vmatpush2.msra.mxu0 0.0
        %619 = vmatprep.subr.mxu0 0.0
        %620 = vmatpush2.msra.mxu0 0.0
        %621 = vmatprep.subr.mxu0 0.0
        %622 = vmatpush2.msra.mxu0 0.0
        %623 = vmatprep.subr.mxu0 0.0
        %624 = vmatpush2.msra.mxu0 0.0
        %625 = vmatprep.mubr.f32.mxu0 0.0
        %626 = vmatmul.mubr.f32.gmra.mxu0 %v559
        %v627 = vpop.f32.mrf.mxu0
        %v628 = vadd.f32 0.0, %v627
        %v629 = vpop.f32.mrf.mxu0
        %630 = vdwg.mxu0
        %631 = vst [vmem:[%s288] sm:$0xff] %v628
        %632 = vst [vmem:[%s295] sm:$0xff] %v537
        %633 = vst.msk [vmem:[%s302] sm:$0xff] %vm455, %v557
        %634 = vst.msk [vmem:[%s309] sm:$0xff] %vm455, %v466
        %s635 = scalar_lea.vmem [#allocation5], 8
        %v636 = vld [vmem:[%s635] sm:$0xff]
        %s637 = scalar_lea.vmem %s2, 1
        %v638 = vld [vmem:[%s637] sm:$0x1]
        %639 = vmatprep.subr.mxu0 0.0
        %640 = vmatpush1.xpose.msra.mxu0 0.0
        %641 = vmatprep.subr.mxu0 0.0
        %642 = vmatpush1.xpose.msra.mxu0 0.0
        %643 = vmatprep.subr.mxu0 0.0
        %644 = vmatpush1.xpose.msra.mxu0 0.0
        %645 = vmatprep.subr.mxu0 0.0
        %646 = vmatpush1.xpose.msra.mxu0 0.0
        %647 = vmatprep.subr.mxu0 0.0
        %648 = vmatpush1.xpose.msra.mxu0 0.0
        %649 = vmatprep.subr.mxu0 0.0
        %650 = vmatpush1.xpose.msra.mxu0 0.0
        %651 = vmatprep.subr.mxu0 0.0
        %652 = vmatpush1.xpose.msra.mxu0 0.0
        %653 = vmatprep.subr.mxu0 0.0
        %654 = vmatpush1.xpose.msra.mxu0 0.0
        %655 = vmatprep.subr.mxu0 0.0
        %656 = vmatpush1.xpose.msra.mxu0 0.0
        %657 = vmatprep.subr.mxu0 0.0
        %658 = vmatpush1.xpose.msra.mxu0 0.0
        %659 = vmatprep.subr.mxu0 0.0
        %660 = vmatpush1.xpose.msra.mxu0 0.0
        %661 = vmatprep.subr.mxu0 0.0
        %662 = vmatpush1.xpose.msra.mxu0 0.0
        %663 = vmatprep.subr.mxu0 0.0
        %664 = vmatpush1.xpose.msra.mxu0 0.0
        %665 = vmatprep.subr.mxu0 0.0
        %666 = vmatpush1.xpose.msra.mxu0 0.0
        %667 = vmatprep.subr.mxu0 0.0
        %668 = vmatpush1.xpose.msra.mxu0 0.0
        %669 = vmatprep.subr.mxu0 0.0
        %670 = vmatpush1.xpose.msra.mxu0 %v636
        %671 = vmatprep.subr.mxu0 0.0
        %672 = vmatpush2.xpose.msra.mxu0 0.0
        %673 = vmatprep.subr.mxu0 0.0
        %674 = vmatpush2.xpose.msra.mxu0 0.0
        %675 = vmatprep.subr.mxu0 0.0
        %676 = vmatpush2.xpose.msra.mxu0 0.0
        %677 = vmatprep.subr.mxu0 0.0
        %678 = vmatpush2.xpose.msra.mxu0 0.0
        %679 = vmatprep.subr.mxu0 0.0
        %680 = vmatpush2.xpose.msra.mxu0 0.0
        %681 = vmatprep.subr.mxu0 0.0
        %682 = vmatpush2.xpose.msra.mxu0 0.0
        %683 = vmatprep.subr.mxu0 0.0
        %684 = vmatpush2.xpose.msra.mxu0 0.0
        %685 = vmatprep.subr.mxu0 0.0
        %686 = vmatpush2.xpose.msra.mxu0 0.0
        %687 = vmatprep.subr.mxu0 0.0
        %688 = vmatpush2.xpose.msra.mxu0 0.0
        %689 = vmatprep.subr.mxu0 0.0
        %690 = vmatpush2.xpose.msra.mxu0 0.0
        %691 = vmatprep.subr.mxu0 0.0
        %692 = vmatpush2.xpose.msra.mxu0 0.0
        %693 = vmatprep.subr.mxu0 0.0
        %694 = vmatpush2.xpose.msra.mxu0 0.0
        %695 = vmatprep.subr.mxu0 0.0
        %696 = vmatpush2.xpose.msra.mxu0 0.0
        %697 = vmatprep.subr.mxu0 0.0
        %698 = vmatpush2.xpose.msra.mxu0 0.0
        %699 = vmatprep.subr.mxu0 0.0
        %700 = vmatpush2.xpose.msra.mxu0 0.0
        %701 = vmatprep.subr.mxu0 0.0
        %702 = vmatpush2.xpose.msra.mxu0 0.0
        %703 = vmatprep.mubr.f32.mxu0 0.0
        %704 = vmatmul.mubr.f32.gmra.mxu0 %v310
        %v705 = vpop.f32.mrf.mxu0
        %v706 = vadd.f32 0.0, %v705
        %v707 = vpop.f32.mrf.mxu0
        %708 = vdwg.mxu0
        %v709 = vmul.f32 %v706, 0.088388346
        %710 = vmatprep.subr.mxu0 0.0
        %711 = vmatpush1.xpose.msra.mxu0 0.0
        %712 = vmatprep.subr.mxu0 0.0
        %713 = vmatpush1.xpose.msra.mxu0 0.0
        %714 = vmatprep.subr.mxu0 0.0
        %715 = vmatpush1.xpose.msra.mxu0 0.0
        %716 = vmatprep.subr.mxu0 0.0
        %717 = vmatpush1.xpose.msra.mxu0 0.0
        %718 = vmatprep.subr.mxu0 0.0
        %719 = vmatpush1.xpose.msra.mxu0 0.0
        %720 = vmatprep.subr.mxu0 0.0
        %721 = vmatpush1.xpose.msra.mxu0 0.0
        %722 = vmatprep.subr.mxu0 0.0
        %723 = vmatpush1.xpose.msra.mxu0 0.0
        %724 = vmatprep.subr.mxu0 0.0
        %725 = vmatpush1.xpose.msra.mxu0 0.0
        %726 = vmatprep.subr.mxu0 0.0
        %727 = vmatpush1.xpose.msra.mxu0 0.0
        %728 = vmatprep.subr.mxu0 0.0
        %729 = vmatpush1.xpose.msra.mxu0 0.0
        %730 = vmatprep.subr.mxu0 0.0
        %731 = vmatpush1.xpose.msra.mxu0 0.0
        %732 = vmatprep.subr.mxu0 0.0
        %733 = vmatpush1.xpose.msra.mxu0 0.0
        %734 = vmatprep.subr.mxu0 0.0
        %735 = vmatpush1.xpose.msra.mxu0 0.0
        %736 = vmatprep.subr.mxu0 0.0
        %737 = vmatpush1.xpose.msra.mxu0 0.0
        %738 = vmatprep.subr.mxu0 0.0
        %739 = vmatpush1.xpose.msra.mxu0 0.0
        %740 = vmatprep.subr.mxu0 0.0
        %741 = vmatpush1.xpose.msra.mxu0 %v310
        %742 = vmatprep.subr.mxu0 0.0
        %743 = vmatpush2.xpose.msra.mxu0 0.0
        %744 = vmatprep.subr.mxu0 0.0
        %745 = vmatpush2.xpose.msra.mxu0 0.0
        %746 = vmatprep.subr.mxu0 0.0
        %747 = vmatpush2.xpose.msra.mxu0 0.0
        %748 = vmatprep.subr.mxu0 0.0
        %749 = vmatpush2.xpose.msra.mxu0 0.0
        %750 = vmatprep.subr.mxu0 0.0
        %751 = vmatpush2.xpose.msra.mxu0 0.0
        %752 = vmatprep.subr.mxu0 0.0
        %753 = vmatpush2.xpose.msra.mxu0 0.0
        %754 = vmatprep.subr.mxu0 0.0
        %755 = vmatpush2.xpose.msra.mxu0 0.0
        %756 = vmatprep.subr.mxu0 0.0
        %757 = vmatpush2.xpose.msra.mxu0 0.0
        %758 = vmatprep.subr.mxu0 0.0
        %759 = vmatpush2.xpose.msra.mxu0 0.0
        %760 = vmatprep.subr.mxu0 0.0
        %761 = vmatpush2.xpose.msra.mxu0 0.0
        %762 = vmatprep.subr.mxu0 0.0
        %763 = vmatpush2.xpose.msra.mxu0 0.0
        %764 = vmatprep.subr.mxu0 0.0
        %765 = vmatpush2.xpose.msra.mxu0 0.0
        %766 = vmatprep.subr.mxu0 0.0
        %767 = vmatpush2.xpose.msra.mxu0 0.0
        %768 = vmatprep.subr.mxu0 0.0
        %769 = vmatpush2.xpose.msra.mxu0 0.0
        %770 = vmatprep.subr.mxu0 0.0
        %771 = vmatpush2.xpose.msra.mxu0 0.0
        %772 = vmatprep.subr.mxu0 0.0
        %773 = vmatpush2.xpose.msra.mxu0 0.0
        %774 = vmatprep.mubr.f32.mxu0 0.0
        %775 = vmatmul.mubr.f32.gmra.mxu0 %v636
        %v776 = vpop.f32.mrf.mxu0
        %v777 = vadd.f32 0.0, %v776
        %v778 = vpop.f32.mrf.mxu0
        %779 = vdwg.mxu0
        %v780 = vmul.f32 %v777, 0.088388346
        %v781 = vsel %vm455, %v780, -inf
        %782 = vmax.xlane.f32.xlu0 %v781
        %v783 = vpop.xlane.xlu0 %782
        %v784 = vsub.f32 %v780, %v783
        %v785 = vmul.f32 %v784, 1.442695
        %v786 = vpow.pop %v785
        %v787 = vsel %vm455, %v786, 0.0
        %788 = vadd.xlane.f32.xlu0 %v787
        %v789 = vpop.xlane.xlu0 %788
        %v790 = vrcp.pop %v789
        %v791 = vmul.f32 %v786, %v790
        %v793 = vsel %vm455, %v791, 0
        %795 = vmatprep.subr.mxu0 0.0
        %796 = vmatpush1.msra.mxu0 0.0
        %797 = vmatprep.subr.mxu0 0.0
        %798 = vmatpush1.msra.mxu0 0.0
        %799 = vmatprep.subr.mxu0 0.0
        %800 = vmatpush1.msra.mxu0 0.0
        %801 = vmatprep.subr.mxu0 0.0
        %802 = vmatpush1.msra.mxu0 0.0
        %803 = vmatprep.subr.mxu0 0.0
        %804 = vmatpush1.msra.mxu0 0.0
        %805 = vmatprep.subr.mxu0 0.0
        %806 = vmatpush1.msra.mxu0 0.0
        %807 = vmatprep.subr.mxu0 0.0
        %808 = vmatpush1.msra.mxu0 0.0
        %809 = vmatprep.subr.mxu0 0.0
        %810 = vmatpush1.msra.mxu0 0.0
        %811 = vmatprep.subr.mxu0 0.0
        %812 = vmatpush1.msra.mxu0 0.0
        %813 = vmatprep.subr.mxu0 0.0
        %814 = vmatpush1.msra.mxu0 0.0
        %815 = vmatprep.subr.mxu0 0.0
        %816 = vmatpush1.msra.mxu0 0.0
        %817 = vmatprep.subr.mxu0 0.0
        %818 = vmatpush1.msra.mxu0 0.0
        %819 = vmatprep.subr.mxu0 0.0
        %820 = vmatpush1.msra.mxu0 0.0
        %821 = vmatprep.subr.mxu0 0.0
        %822 = vmatpush1.msra.mxu0 0.0
        %823 = vmatprep.subr.mxu0 0.0
        %824 = vmatpush1.msra.mxu0 0.0
        %825 = vmatprep.subr.mxu0 0.0
        %826 = vmatpush1.msra.mxu0 %v310
        %827 = vmatprep.subr.mxu0 0.0
        %828 = vmatpush2.msra.mxu0 0.0
        %829 = vmatprep.subr.mxu0 0.0
        %830 = vmatpush2.msra.mxu0 0.0
        %831 = vmatprep.subr.mxu0 0.0
        %832 = vmatpush2.msra.mxu0 0.0
        %833 = vmatprep.subr.mxu0 0.0
        %834 = vmatpush2.msra.mxu0 0.0
        %835 = vmatprep.subr.mxu0 0.0
        %836 = vmatpush2.msra.mxu0 0.0
        %837 = vmatprep.subr.mxu0 0.0
        %838 = vmatpush2.msra.mxu0 0.0
        %839 = vmatprep.subr.mxu0 0.0
        %840 = vmatpush2.msra.mxu0 0.0
        %841 = vmatprep.subr.mxu0 0.0
        %842 = vmatpush2.msra.mxu0 0.0
        %843 = vmatprep.subr.mxu0 0.0
        %844 = vmatpush2.msra.mxu0 0.0
        %845 = vmatprep.subr.mxu0 0.0
        %846 = vmatpush2.msra.mxu0 0.0
        %847 = vmatprep.subr.mxu0 0.0
        %848 = vmatpush2.msra.mxu0 0.0
        %849 = vmatprep.subr.mxu0 0.0
        %850 = vmatpush2.msra.mxu0 0.0
        %851 = vmatprep.subr.mxu0 0.0
        %852 = vmatpush2.msra.mxu0 0.0
        %853 = vmatprep.subr.mxu0 0.0
        %854 = vmatpush2.msra.mxu0 0.0
        %855 = vmatprep.subr.mxu0 0.0
        %856 = vmatpush2.msra.mxu0 0.0
        %857 = vmatprep.subr.mxu0 0.0
        %858 = vmatpush2.msra.mxu0 0.0
        %859 = vmatprep.mubr.f32.mxu0 0.0
        %860 = vmatmul.mubr.f32.gmra.mxu0 %v793
        %v861 = vpop.f32.mrf.mxu0
        %v862 = vadd.f32 0.0, %v861
        %v863 = vpop.f32.mrf.mxu0
        %864 = vdwg.mxu0
        %v866 = vlaneseq
        %v867 = vshrl.u32 %v866, 7
        %v868 = vsub.s32 0, %v867
        %v869 = vrot.slane %v638, %v868
        %v871 = vadd.f32 %v709, %v869
        %v872 = vsel %vm455, %v871, -inf
        %873 = vmax.xlane.f32.xlu0 %v872
        %v874 = vpop.xlane.xlu0 %873
        %v875 = vsub.f32 %v871, %v874
        %v876 = vmul.f32 %v875, 1.442695
        %v877 = vpow.pop %v876
        %v878 = vsel %vm455, %v877, 0.0
        %879 = vadd.xlane.f32.xlu0 %v878
        %v880 = vpop.xlane.xlu0 %879
        %v881 = vrcp.pop %v880
        %v882 = vmul.f32 %v877, %v881
        %v884 = vsel %vm455, %v882, 0
        %886 = vmatprep.subr.mxu0 0.0
        %887 = vmatpush1.msra.mxu0 0.0
        %888 = vmatprep.subr.mxu0 0.0
        %889 = vmatpush1.msra.mxu0 0.0
        %890 = vmatprep.subr.mxu0 0.0
        %891 = vmatpush1.msra.mxu0 0.0
        %892 = vmatprep.subr.mxu0 0.0
        %893 = vmatpush1.msra.mxu0 0.0
        %894 = vmatprep.subr.mxu0 0.0
        %895 = vmatpush1.msra.mxu0 0.0
        %896 = vmatprep.subr.mxu0 0.0
        %897 = vmatpush1.msra.mxu0 0.0
        %898 = vmatprep.subr.mxu0 0.0
        %899 = vmatpush1.msra.mxu0 0.0
        %900 = vmatprep.subr.mxu0 0.0
        %901 = vmatpush1.msra.mxu0 0.0
        %902 = vmatprep.subr.mxu0 0.0
        %903 = vmatpush1.msra.mxu0 0.0
        %904 = vmatprep.subr.mxu0 0.0
        %905 = vmatpush1.msra.mxu0 0.0
        %906 = vmatprep.subr.mxu0 0.0
        %907 = vmatpush1.msra.mxu0 0.0
        %908 = vmatprep.subr.mxu0 0.0
        %909 = vmatpush1.msra.mxu0 0.0
        %910 = vmatprep.subr.mxu0 0.0
        %911 = vmatpush1.msra.mxu0 0.0
        %912 = vmatprep.subr.mxu0 0.0
        %913 = vmatpush1.msra.mxu0 0.0
        %914 = vmatprep.subr.mxu0 0.0
        %915 = vmatpush1.msra.mxu0 0.0
        %916 = vmatprep.subr.mxu0 0.0
        %917 = vmatpush1.msra.mxu0 %v636
        %918 = vmatprep.subr.mxu0 0.0
        %919 = vmatpush2.msra.mxu0 0.0
        %920 = vmatprep.subr.mxu0 0.0
        %921 = vmatpush2.msra.mxu0 0.0
        %922 = vmatprep.subr.mxu0 0.0
        %923 = vmatpush2.msra.mxu0 0.0
        %924 = vmatprep.subr.mxu0 0.0
        %925 = vmatpush2.msra.mxu0 0.0
        %926 = vmatprep.subr.mxu0 0.0
        %927 = vmatpush2.msra.mxu0 0.0
        %928 = vmatprep.subr.mxu0 0.0
        %929 = vmatpush2.msra.mxu0 0.0
        %930 = vmatprep.subr.mxu0 0.0
        %931 = vmatpush2.msra.mxu0 0.0
        %932 = vmatprep.subr.mxu0 0.0
        %933 = vmatpush2.msra.mxu0 0.0
        %934 = vmatprep.subr.mxu0 0.0
        %935 = vmatpush2.msra.mxu0 0.0
        %936 = vmatprep.subr.mxu0 0.0
        %937 = vmatpush2.msra.mxu0 0.0
        %938 = vmatprep.subr.mxu0 0.0
        %939 = vmatpush2.msra.mxu0 0.0
        %940 = vmatprep.subr.mxu0 0.0
        %941 = vmatpush2.msra.mxu0 0.0
        %942 = vmatprep.subr.mxu0 0.0
        %943 = vmatpush2.msra.mxu0 0.0
        %944 = vmatprep.subr.mxu0 0.0
        %945 = vmatpush2.msra.mxu0 0.0
        %946 = vmatprep.subr.mxu0 0.0
        %947 = vmatpush2.msra.mxu0 0.0
        %948 = vmatprep.subr.mxu0 0.0
        %949 = vmatpush2.msra.mxu0 0.0
        %950 = vmatprep.mubr.f32.mxu0 0.0
        %951 = vmatmul.mubr.f32.gmra.mxu0 %v884
        %v952 = vpop.f32.mrf.mxu0
        %v953 = vadd.f32 0.0, %v952
        %v954 = vpop.f32.mrf.mxu0
        %955 = vdwg.mxu0
        %s956 = scalar_lea.vmem %s288, 8 [#allocation7]
        %957 = vst [vmem:[%s956] sm:$0xff] %v953
        %s958 = scalar_lea.vmem %s295, 8 [#allocation8]
        %959 = vst [vmem:[%s958] sm:$0xff] %v862
        %s960 = scalar_lea.vmem %s302, 8 [#allocation10]
        %961 = vst.msk [vmem:[%s960] sm:$0xff] %vm455, %v882
        %s962 = scalar_lea.vmem %s309, 8 [#allocation11]
        %963 = vst.msk [vmem:[%s962] sm:$0xff] %vm455, %v791
        %s964 = sand.u32 %s107, 1
        %s965 = scalar_lea.sflag [#allocation4], %s964
        %s966 = sand.u32 %s107, 1
        %s967 = smul.addr %s966, 16
        %s968 = scalar_lea.vmem [#allocation7], %s967
        %s969 = sand.u32 %s31, 1
        %s970 = scalar_lea.sflag [#allocation9], %s969
        %s971 = sand.u32 %s133, 1
        %s972 = smul.addr %s971, 16
        %s973 = scalar_lea.vmem [#allocation8], %s972
        %s974 = sand.u32 %s31, 1
        %s975 = scalar_lea.sflag [#allocation9], %s974
        %s976 = sand.u32 %s159, 1
        %s977 = smul.addr %s976, 16
        %s978 = scalar_lea.vmem [#allocation10], %s977
        %s979 = sand.u32 %s185, 1
        %s980 = scalar_lea.sflag [#allocation12], %s979
        %s981 = sand.u32 %s185, 1
        %s982 = smul.addr %s981, 16
        %s983 = scalar_lea.vmem [#allocation11], %s982
        // Predicated region
        $region41: #{tpu_custom_call.1} parent=31 // pred_check
          %p984 = pneg %p117
        $region42: #{tpu_custom_call.1} parent=31 // pred_check_branch
          %986 = sbr.rel (%p984) target = $region44
        $region43: #{tpu_custom_call.1} parent=31 // pred_region
          %s988 = ssub.s32 256, 256
          %989 = vsyncadd %s965, %s988
          %s990 = smul.addr %s31, 2
          %s991 = smul.addr %s990, 128
          %s992 = scalar_lea.hbm %s3, %s991
          %s993 = sshll.u32 %s968, 4
          %s994 = int_to_ptr.vmem [resolvable:$true] %s993
          %999 = dma.vmem_to_hbm [thread:$0]  %s994, 256, %s992, %s965, 128, 128, 8
        $region44: #{tpu_custom_call.1} parent=31 // pred_fallthru
          _
        // Predicated region
        $region45: #{tpu_custom_call.1} parent=31 // pred_check
          %p1000 = pneg %p143
        $region46: #{tpu_custom_call.1} parent=31 // pred_check_branch
          %1002 = sbr.rel (%p1000) target = $region48
        $region47: #{tpu_custom_call.1} parent=31 // pred_region
          %s1004 = ssub.s32 256, 256
          %1005 = vsyncadd %s970, %s1004
          %s1006 = smul.addr %s31, 2
          %s1007 = smul.addr %s1006, 128
          %s1008 = scalar_lea.hbm %s4, %s1007
          %s1009 = sshll.u32 %s973, 4
          %s1010 = int_to_ptr.vmem [resolvable:$true] %s1009
          %1015 = dma.vmem_to_hbm [thread:$0]  %s1010, 256, %s1008, %s970, 128, 128, 8
        $region48: #{tpu_custom_call.1} parent=31 // pred_fallthru
          _
        // Predicated region
        $region49: #{tpu_custom_call.1} parent=31 // pred_check
          %p1016 = pneg %p169
        $region50: #{tpu_custom_call.1} parent=31 // pred_check_branch
          %1018 = sbr.rel (%p1016) target = $region52
        $region51: #{tpu_custom_call.1} parent=31 // pred_region
          %s1020 = ssub.s32 256, 256
          %1021 = vsyncadd %s975, %s1020
          %s1022 = smul.addr %s31, 2
          %s1023 = smul.addr %s1022, 128
          %s1024 = scalar_lea.hbm %s5, %s1023
          %s1025 = sshll.u32 %s978, 4
          %s1026 = int_to_ptr.vmem [resolvable:$true] %s1025
          %1031 = dma.vmem_to_hbm [thread:$0]  %s1026, 256, %s1024, %s975, 128, 128, 8
        $region52: #{tpu_custom_call.1} parent=31 // pred_fallthru
          _
        // Predicated region
        $region53: #{tpu_custom_call.1} parent=31 // pred_check
          %p1032 = pneg %p195
        $region54: #{tpu_custom_call.1} parent=31 // pred_check_branch
          %1034 = sbr.rel (%p1032) target = $region56
        $region55: #{tpu_custom_call.1} parent=31 // pred_region
          %s1036 = ssub.s32 256, 256
          %1037 = vsyncadd %s980, %s1036
          %s1038 = smul.addr %s31, 2
          %s1039 = smul.addr %s1038, 128
          %s1040 = scalar_lea.hbm %s6, %s1039
          %s1041 = sshll.u32 %s983, 4
          %s1042 = int_to_ptr.vmem [resolvable:$true] %s1041
          %1047 = dma.vmem_to_hbm [thread:$0]  %s1042, 256, %s1040, %s980, 128, 128, 8
        $region56: #{tpu_custom_call.1} parent=31 // pred_fallthru
          _
      $region32: #{tpu_custom_call.1} parent=5 // pred_fallthru
        _
      %p1048 = scmp.le.s32.totalorder 2, %s26
      // Predicated region
      $region57: #{tpu_custom_call.1} parent=5 // pred_check
        %p1049 = pneg %p1048
      $region58: #{tpu_custom_call.1} parent=5 // pred_check_branch
        %1051 = sbr.rel (%p1049) target = $region60
      $region59: #{tpu_custom_call.1} parent=5 // pred_region
        %s1052 = ssub.s32 %s26, 2
        // Predicated region
        $region61: #{tpu_custom_call.1} parent=59 // pred_check
          %p1053 = pneg %p123
        $region62: #{tpu_custom_call.1} parent=59 // pred_check_branch
          %1055 = sbr.rel (%p1053) target = $region64
        $region63: #{tpu_custom_call.1} parent=59 // pred_region
          %s1056 = sand.u32 %s108, 1
          %s1057 = scalar_lea.sflag [#allocation4], %s1056
          %s1058 = sand.u32 %s108, 1
          %s1059 = smul.addr %s1058, 16
          %s1060 = scalar_lea.vmem [#allocation7], %s1059
          %1061 = dma.done %s1057, 256
        $region64: #{tpu_custom_call.1} parent=59 // pred_fallthru
          _
        // Predicated region
        $region65: #{tpu_custom_call.1} parent=59 // pred_check
          %p1062 = pneg %p149
        $region66: #{tpu_custom_call.1} parent=59 // pred_check_branch
          %1064 = sbr.rel (%p1062) target = $region68
        $region67: #{tpu_custom_call.1} parent=59 // pred_region
          %s1065 = sand.u32 %s32, 1
          %s1066 = scalar_lea.sflag [#allocation9], %s1065
          %s1067 = sand.u32 %s134, 1
          %s1068 = smul.addr %s1067, 16
          %s1069 = scalar_lea.vmem [#allocation8], %s1068
          %1070 = dma.done %s1066, 256
        $region68: #{tpu_custom_call.1} parent=59 // pred_fallthru
          _
        // Predicated region
        $region69: #{tpu_custom_call.1} parent=59 // pred_check
          %p1071 = pneg %p175
        $region70: #{tpu_custom_call.1} parent=59 // pred_check_branch
          %1073 = sbr.rel (%p1071) target = $region72
        $region71: #{tpu_custom_call.1} parent=59 // pred_region
          %s1074 = sand.u32 %s32, 1
          %s1075 = scalar_lea.sflag [#allocation9], %s1074
          %s1076 = sand.u32 %s160, 1
          %s1077 = smul.addr %s1076, 16
          %s1078 = scalar_lea.vmem [#allocation10], %s1077
          %1079 = dma.done %s1075, 256
        $region72: #{tpu_custom_call.1} parent=59 // pred_fallthru
          _
        // Predicated region
        $region73: #{tpu_custom_call.1} parent=59 // pred_check
          %p1080 = pneg %p201
        $region74: #{tpu_custom_call.1} parent=59 // pred_check_branch
          %1082 = sbr.rel (%p1080) target = $region76
        $region75: #{tpu_custom_call.1} parent=59 // pred_region
          %s1083 = sand.u32 %s186, 1
          %s1084 = scalar_lea.sflag [#allocation12], %s1083
          %s1085 = sand.u32 %s186, 1
          %s1086 = smul.addr %s1085, 16
          %s1087 = scalar_lea.vmem [#allocation11], %s1086
          %1088 = dma.done %s1084, 256
        $region76: #{tpu_custom_call.1} parent=59 // pred_fallthru
          _
      $region60: #{tpu_custom_call.1} parent=5 // pred_fallthru
        _
    $region6: #{tpu_custom_call.1} parent=1 // loop_footer
      %s30 = sadd.s32 1, %s26
    $region7: #{tpu_custom_call.1} parent=1 // loop_footer_branch
      %25 = sbr.rel target = $region3
    $region8: #{tpu_custom_call.1} parent=1 // loop_exit
      _
    %1089 = vsyncpa [#allocation3], 1
    %s1090 = scalar_lea.sflag [#allocation3], 1
    %1091 = vsyncpa %s1090, 1
    %1092 = vsyncpa [#allocation6], 1
    %1093 = vsyncpa [#allocation4], 1
    %s1094 = scalar_lea.sflag [#allocation4], 1
    %1095 = vsyncpa %s1094, 1
    %1096 = vsyncpa [#allocation9], 1
    %s1097 = scalar_lea.sflag [#allocation9], 1
    %1098 = vsyncpa %s1097, 1
    %1099 = vsyncpa [#allocation12], 1
    %s1100 = scalar_lea.sflag [#allocation12], 1
    %1101 = vsyncpa %s1100, 1

</llo_original>
